<compile_context>
chip_gen: v7x
topology: tpu7x:2x2x1
jax: 0.10.0
libtpu: 0.0.40
codegen_flags: <defaults>
</compile_context>

<pallas_src>
import jax
import jax.numpy as jnp
from jax.experimental import pallas as pl
from jax.experimental.pallas import tpu as pltpu

_ONE_THIRD = 1.0 / 3.0


def _elementwise_kernel(x_ref, o_ref):
    x = x_ref[...]
    # (x + 2) * (x - 1) / 3, with the constant divide folded into a multiply.
    o_ref[...] = ((x + 2.0) * (x - 1.0)) * _ONE_THIRD


def _sublane_multiple(dtype) -> int:
    # f32 -> 8, bf16/f16 -> 16, int8/fp8 -> 32 (second-to-last dim tiling).
    itemsize = jnp.dtype(dtype).itemsize
    return max(8, 32 // itemsize)


def pt_module_forward(x):
    """Computes (x + 2) * (x - 1) / 3 elementwise with a Pallas TPU kernel."""
    orig_shape = x.shape
    dtype = x.dtype
    n = x.size
    itemsize = jnp.dtype(dtype).itemsize
    sub = _sublane_multiple(dtype)

    # Pick a wide lane-dense width (multiple of 128) that divides n exactly,
    # so the reshape is a free bitcast: no pad, no post-slice, no extra HBM pass.
    width = 0
    for w in (4096, 2048, 1024, 512, 256, 128):
        if n % w == 0:
            width = w
            break

    if width == 0:
        # Ragged fallback: n not a multiple of 128 -> pad once, slice once.
        # TODO(synk): could be avoided entirely with a masked 1D tail kernel.
        width = 128
        rows = pl.cdiv(n, width)
        x2d = jnp.pad(jnp.ravel(x), (0, rows * width - n)).reshape(rows, width)
        ragged = True
    else:
        rows = n // width
        x2d = jnp.ravel(x).reshape(rows, width)
        ragged = False

    # Block sizing: target ~4 MiB blocks.  Double-buffered input + output
    # (~4x block) stays well inside scoped VMEM on v5e/v6e/v7x with the
    # explicit 32 MiB limit below, while being large enough to hide per-grid
    # step overhead and saturate HBM bandwidth.
    target_block_bytes = 4 * 1024 * 1024
    tile_rows = max(sub, target_block_bytes // (width * itemsize))
    tile_rows = (tile_rows // sub) * sub  # keep dtype tiling constraint

    total_bytes = rows * width * itemsize
    if tile_rows >= rows:
        if total_bytes > (1 << 20) and rows >= 2 * sub:
            # Split medium inputs into >=2 blocks so both v7x TensorCores
            # (and the DMA pipeline) get work; neutral on v5e/v6e.
            tile_rows = max(sub, (rows // 2 // sub) * sub)
        else:
            tile_rows = rows  # single block == full array dims (always legal)

    grid = (pl.cdiv(rows, tile_rows),)

    out2d = pl.pallas_call(
        _elementwise_kernel,
        out_shape=jax.ShapeDtypeStruct((rows, width), dtype),
        grid_spec=pl.GridSpec(
            grid=grid,
            in_specs=[pl.BlockSpec((tile_rows, width), lambda i: (i, 0))],
            out_specs=pl.BlockSpec((tile_rows, width), lambda i: (i, 0)),
        ),
        compiler_params=pltpu.CompilerParams(
            dimension_semantics=("parallel",),
            vmem_limit_bytes=32 * 1024 * 1024,
        ),
    )(x2d)

    if ragged:
        return out2d.reshape(-1)[:n].reshape(orig_shape)
    return out2d.reshape(orig_shape)


def _reference(x):
    return (x + 2.0) * (x - 1.0) / 3.0


if __name__ == "__main__":
    key = jax.random.PRNGKey(0)

    # Primary (module-sized) input: NCHW (2, 4, 16, 16).
    x = jax.random.normal(key, (2, 4, 16, 16), dtype=jnp.float32)
    y = pt_module_forward(x)
    jax.block_until_ready(y)
    assert y.shape == x.shape and y.dtype == x.dtype
    assert jnp.allclose(y, _reference(x), atol=1e-6, rtol=1e-5)

    # Larger input: exercises the multi-block pipelined path.
    k2 = jax.random.PRNGKey(1)
    x_big = jax.random.normal(k2, (8, 64, 56, 56), dtype=jnp.float32)
    y_big = pt_module_forward(x_big)
    jax.block_until_ready(y_big)
    assert jnp.allclose(y_big, _reference(x_big), atol=1e-6, rtol=1e-5)

    # Ragged input (n % 128 != 0): exercises the fallback path.
    k3 = jax.random.PRNGKey(2)
    x_rag = jax.random.normal(k3, (3, 5, 7), dtype=jnp.float32)
    y_rag = pt_module_forward(x_rag)
    jax.block_until_ready(y_rag)
    assert jnp.allclose(y_rag, _reference(x_rag), atol=1e-6, rtol=1e-5)

    print("KERNEL_OK")
</pallas_src>

<mosaic_0001>
module attributes {stable_mosaic.version = 11 : i64} {
  func.func @_elementwise_kernel(%arg0: i32, %arg1: memref<1x2048xf32, #tpu.memory_space<vmem>>, %arg2: memref<1x2048xf32, #tpu.memory_space<vmem>>) attributes {dimension_semantics = [#tpu.dimension_semantics<parallel>], iteration_bounds = array<i64: 1>, scalar_prefetch = 0 : i64, scratch_operands = 0 : i64, tpu.core_type = #tpu.core_type<tc>, window_params = [{transform_indices = @transform_0, window_bounds = array<i64: 1, 2048>}, {transform_indices = @transform_1, window_bounds = array<i64: 1, 2048>}]} {
    %c0 = arith.constant 0 : index
    %c0_0 = arith.constant 0 : index
    %0 = vector.load %arg1[%c0, %c0_0] : memref<1x2048xf32, #tpu.memory_space<vmem>>, vector<1x2048xf32>
    %cst = arith.constant 2.000000e+00 : f32
    %1 = vector.broadcast %cst : f32 to vector<1x2048xf32>
    %2 = arith.addf %0, %1 : vector<1x2048xf32>
    %cst_1 = arith.constant 1.000000e+00 : f32
    %3 = vector.broadcast %cst_1 : f32 to vector<1x2048xf32>
    %4 = arith.subf %0, %3 : vector<1x2048xf32>
    %5 = arith.mulf %2, %4 : vector<1x2048xf32>
    %cst_2 = arith.constant 0.333333343 : f32
    %6 = vector.broadcast %cst_2 : f32 to vector<1x2048xf32>
    %7 = arith.mulf %5, %6 : vector<1x2048xf32>
    %c0_3 = arith.constant 0 : index
    %c0_4 = arith.constant 0 : index
    %8 = vector.load %arg2[%c0_3, %c0_4] : memref<1x2048xf32, #tpu.memory_space<vmem>>, vector<1x2048xf32>
    tpu.vector_store %arg2[%c0_3, %c0_4], %7 {strides = array<i32>} : memref<1x2048xf32, #tpu.memory_space<vmem>>, vector<1x2048xf32>,
    return
  }
  func.func @transform_0(%arg0: i32) -> (i32, i32) {
    %c0_i32 = arith.constant 0 : i32
    %c0_i32_0 = arith.constant 0 : i32
    return %arg0, %c0_i32 : i32, i32
  }
  func.func @transform_1(%arg0: i32) -> (i32, i32) {
    %c0_i32 = arith.constant 0 : i32
    %c0_i32_0 = arith.constant 0 : i32
    return %arg0, %c0_i32 : i32, i32
  }
}

</mosaic_0001>

<llo_original>
// kernel: tpu_custom_call.1
$region0: #{tpu_custom_call.1}
  #allocation0 [shape = 'u32[]', space=smem, size = 0x4, offset = 0x4, fixed_abs, tag = 'smem constant byte address 0x4 - core index']
  #allocation1 [shape = 'u32[144,128]{1,0:T(1,128)}', space=vmem, size = 0x12000, scoped, tag = 'internal scratch']
  %s0 = inlined_call_operand.hbm [shape: f32[1,2048], index: 0, kind: input, shape index: {}]
  %s1 = inlined_call_operand.hbm [shape: f32[1,2048], index: 1, kind: output, shape index: {}]
  %s2 = sld [smem:[#allocation0]]
  $region18: #{tpu_custom_call.1} parent=0
    _
  %s4 = ssub.s32 1, %s2
  %s5 = scalar_select 0, %s4, %s2
  $region1: #{tpu_custom_call.1} parent=0
    #allocation2 [shape = 'u8[8192]{0}', space=vmem, size = 0x2000, scoped, tag = 'input window, operand 0, single buffered']
    #allocation3 [shape = 's32[1]{0}', space=sflag, size = 0x4, scoped, tag = 'scoped memory for tpu_custom_call.1']
    #allocation4 [shape = 's32[1]{0}', space=sflag, size = 0x4, scoped, tag = 'scoped memory for tpu_custom_call.1']
    #allocation5 [shape = 'u8[8192]{0}', space=vmem, size = 0x2000, scoped, tag = 'output window, operand 0, single buffered']
    %6 = vsyncpa [#allocation3], 0
    %7 = vsyncpa [#allocation4], 0
    // Predicated region
    $region2: #{tpu_custom_call.1} parent=1 // pred_check
      _
    $region3: #{tpu_custom_call.1} parent=1 // pred_check_branch
      %9 = sbr.rel (0) target = $region5
    $region4: #{tpu_custom_call.1} parent=1 // pred_region
      %s11 = ssub.s32 256, 256
      %12 = vsyncadd [#allocation3], %s11
      %s14 = sshll.u32 [#allocation2], 4
      %s15 = int_to_ptr.vmem [resolvable:$true] %s14
      %17 = dma.hbm_to_vmem [thread:$0]  %s0, 256, %s15, [#allocation3]
    $region5: #{tpu_custom_call.1} parent=1 // pred_fallthru
      _
    // Predicated region
    $region6: #{tpu_custom_call.1} parent=1 // pred_check
      _
    $region7: #{tpu_custom_call.1} parent=1 // pred_check_branch
      %19 = sbr.rel (0) target = $region9
    $region8: #{tpu_custom_call.1} parent=1 // pred_region
      %20 = dma.done [#allocation3], 256
    $region9: #{tpu_custom_call.1} parent=1 // pred_fallthru
      _
    %v21 = vld [vmem:[#allocation2] sm:$0xff]
    %v22 = vld [vmem:[#allocation2 + $0x8] sm:$0xff]
    %v23 = vadd.f32 %v21, 2.0
    %v24 = vadd.f32 %v22, 2.0
    %v25 = vsub.f32 %v21, 1.0
    %v26 = vsub.f32 %v22, 1.0
    %v27 = vmul.f32 %v23, %v25
    %v28 = vmul.f32 %v24, %v26
    %v29 = vmul.f32 %v27, 0.33333334
    %v30 = vmul.f32 %v28, 0.33333334
    %31 = vst [vmem:[#allocation5] sm:$0xff] %v29
    %32 = vst [vmem:[#allocation5 + $0x8] sm:$0xff] %v30
    // Predicated region
    $region10: #{tpu_custom_call.1} parent=1 // pred_check
      _
    $region11: #{tpu_custom_call.1} parent=1 // pred_check_branch
      %34 = sbr.rel (0) target = $region13
    $region12: #{tpu_custom_call.1} parent=1 // pred_region
      %s36 = ssub.s32 256, 256
      %37 = vsyncadd [#allocation4], %s36
      %s39 = sshll.u32 [#allocation5], 4
      %s40 = int_to_ptr.vmem [resolvable:$true] %s39
      %42 = dma.vmem_to_hbm [thread:$0]  %s40, 256, %s1, [#allocation4]
    $region13: #{tpu_custom_call.1} parent=1 // pred_fallthru
      _
    // Predicated region
    $region14: #{tpu_custom_call.1} parent=1 // pred_check
      _
    $region15: #{tpu_custom_call.1} parent=1 // pred_check_branch
      %44 = sbr.rel (0) target = $region17
    $region16: #{tpu_custom_call.1} parent=1 // pred_region
      %45 = dma.done [#allocation4], 256
    $region17: #{tpu_custom_call.1} parent=1 // pred_fallthru
      _
    %46 = vsyncpa [#allocation3], 1
    %47 = vsyncpa [#allocation4], 1

</llo_original>
